<compile_context>
chip_gen: v7x
topology: tpu7x:2x2x1
jax: 0.10.0
libtpu: 0.0.40
codegen_flags: <defaults>
</compile_context>

<pallas_src>
import jax
import jax.numpy as jnp
from jax import lax
from jax.experimental import pallas as pl
from jax.experimental.pallas import tpu as pltpu


_LANES = 128
_TARGET_BLOCK_BYTES = 4 * 1024 * 1024   # ~4 MiB per block (in), 16 MiB dbl-buffered in+out
_MIN_GRID_TARGET = 4                    # >=2 blocks per TC on v7x's 2 cores
_VMEM_LIMIT_BYTES = 32 * 1024 * 1024    # explicit so v5e (16 MiB default) stays portable


def _sublane_multiple(dtype) -> int:
    itemsize = jnp.dtype(dtype).itemsize
    if itemsize >= 4:
        return 8
    if itemsize == 2:
        return 16
    return 32


def _round_up(x: int, m: int) -> int:
    return -(-x // m) * m


def _gelu_kernel(x_ref, o_ref):
    x = x_ref[...]
    # Exact GELU: 0.5 * x * (1 + erf(x / sqrt(2)))  (torch default, approximate='none')
    xf = x.astype(jnp.float32)
    inv_sqrt2 = jnp.float32(0.7071067811865476)
    out = 0.5 * xf * (1.0 + lax.erf(xf * inv_sqrt2))
    o_ref[...] = out.astype(o_ref.dtype)


def gelu_pallas(x: jax.Array) -> jax.Array:
    """Apply exact (erf) GELU elementwise via a Pallas TPU kernel."""
    orig_shape = x.shape
    dtype = x.dtype
    n = x.size
    if n == 0:
        return x

    itemsize = jnp.dtype(dtype).itemsize
    sub = _sublane_multiple(dtype)

    rows = -(-n // _LANES)                      # cdiv over the lane dim
    padded_rows = _round_up(rows, sub)          # minimal pad: lane-width * sublane pack only
    padded_n = padded_rows * _LANES
    needs_pad = padded_n != n

    # Byte-budget tile (cap first), then shrink only as far as needed to keep
    # >= _MIN_GRID_TARGET grid steps for megacore sharding.  Never below one
    # packed sublane group.
    cap_rows = max(sub, (_TARGET_BLOCK_BYTES // (_LANES * itemsize)) // sub * sub)
    want_rows = _round_up(max(1, -(-padded_rows // _MIN_GRID_TARGET)), sub)
    row_tile = max(sub, min(cap_rows, want_rows))

    grid = (pl.cdiv(padded_rows, row_tile),)    # partial last block handled by Pallas

    x_flat = x.reshape(-1)
    if needs_pad:
        # GELU(0) == 0, so zero padding is safe; the tail is sliced off below.
        x_flat = jnp.pad(x_flat, (0, padded_n - n))
    x2d = x_flat.reshape(padded_rows, _LANES)

    cost = pl.CostEstimate(
        flops=22 * padded_n,                    # erf poly + surrounding mul/add
        transcendentals=padded_n,
        bytes_accessed=2 * padded_n * itemsize,
    )

    out2d = pl.pallas_call(
        _gelu_kernel,
        out_shape=jax.ShapeDtypeStruct((padded_rows, _LANES), dtype),
        grid_spec=pltpu.PrefetchScalarGridSpec(
            num_scalar_prefetch=0,
            grid=grid,
            in_specs=[pl.BlockSpec((row_tile, _LANES), lambda i: (i, 0))],
            out_specs=pl.BlockSpec((row_tile, _LANES), lambda i: (i, 0)),
        ),
        compiler_params=pltpu.CompilerParams(
            dimension_semantics=("parallel",),
            vmem_limit_bytes=_VMEM_LIMIT_BYTES,
        ),
        cost_estimate=cost,
    )(x2d)

    out_flat = out2d.reshape(-1)
    if needs_pad:
        out_flat = out_flat[:n]
    return out_flat.reshape(orig_shape)


if __name__ == "__main__":
    key = jax.random.PRNGKey(0)
    # Small NCHW-like input consistent with typical conv activations.
    x = jax.random.normal(key, (2, 4, 16, 16), dtype=jnp.float32)

    y = gelu_pallas(x)
    jax.block_until_ready(y)
    y_ref = jax.nn.gelu(x, approximate=False)
    assert jnp.allclose(y, y_ref, atol=1e-5, rtol=1e-5), "f32 mismatch vs reference"

    # bf16 path exercises the dtype-aware (16,128)-packed tile.
    xb = x.astype(jnp.bfloat16)
    yb = gelu_pallas(xb)
    jax.block_until_ready(yb)
    yb_ref = jax.nn.gelu(xb.astype(jnp.float32), approximate=False).astype(jnp.bfloat16)
    assert jnp.allclose(
        yb.astype(jnp.float32), yb_ref.astype(jnp.float32), atol=2e-2, rtol=2e-2
    ), "bf16 mismatch vs reference"

    # Ragged size exercises the minimal pad/slice fallback path.
    xr = jax.random.normal(jax.random.PRNGKey(1), (3, 5, 7), dtype=jnp.float32)
    yr = gelu_pallas(xr)
    jax.block_until_ready(yr)
    assert jnp.allclose(
        yr, jax.nn.gelu(xr, approximate=False), atol=1e-5, rtol=1e-5
    ), "ragged mismatch vs reference"

    # Size that is lane-aligned but NOT row_tile-aligned exercises the
    # partial-last-block (no-copy) path.
    xo = jax.random.normal(jax.random.PRNGKey(2), (24, 128), dtype=jnp.float32)
    yo = gelu_pallas(xo)
    jax.block_until_ready(yo)
    assert jnp.allclose(
        yo, jax.nn.gelu(xo, approximate=False), atol=1e-5, rtol=1e-5
    ), "partial-block mismatch vs reference"

    print("KERNEL_OK")
</pallas_src>

<mosaic_0001>
module attributes {stable_mosaic.version = 11 : i64} {
  func.func @_gelu_kernel(%arg0: i32, %arg1: memref<8x128xf32, #tpu.memory_space<vmem>>, %arg2: memref<8x128xf32, #tpu.memory_space<vmem>>) attributes {dimension_semantics = [#tpu.dimension_semantics<parallel>], iteration_bounds = array<i64: 2>, scalar_prefetch = 0 : i64, scratch_operands = 0 : i64, tpu.core_type = #tpu.core_type<tc>, window_params = [{transform_indices = @transform_0, window_bounds = array<i64: 8, 128>}, {transform_indices = @transform_1, window_bounds = array<i64: 8, 128>}]} {
    %c0 = arith.constant 0 : index
    %c0_0 = arith.constant 0 : index
    %0 = vector.load %arg1[%c0, %c0_0] : memref<8x128xf32, #tpu.memory_space<vmem>>, vector<8x128xf32>
    %cst = arith.constant 5.000000e-01 : f32
    %1 = vector.broadcast %cst : f32 to vector<8x128xf32>
    %2 = arith.mulf %1, %0 : vector<8x128xf32>
    %cst_1 = arith.constant 0.707106769 : f32
    %3 = vector.broadcast %cst_1 : f32 to vector<8x128xf32>
    %4 = arith.mulf %0, %3 : vector<8x128xf32>
    %5 = math.erf %4 : vector<8x128xf32>
    %cst_2 = arith.constant 1.000000e+00 : f32
    %6 = vector.broadcast %cst_2 : f32 to vector<8x128xf32>
    %7 = arith.addf %6, %5 : vector<8x128xf32>
    %8 = arith.mulf %2, %7 : vector<8x128xf32>
    %c0_3 = arith.constant 0 : index
    %c0_4 = arith.constant 0 : index
    %9 = vector.load %arg2[%c0_3, %c0_4] : memref<8x128xf32, #tpu.memory_space<vmem>>, vector<8x128xf32>
    tpu.vector_store %arg2[%c0_3, %c0_4], %8 {strides = array<i32>} : memref<8x128xf32, #tpu.memory_space<vmem>>, vector<8x128xf32>,
    return
  }
  func.func @transform_0(%arg0: i32) -> (i32, i32) {
    %c0_i32 = arith.constant 0 : i32
    %c0_i32_0 = arith.constant 0 : i32
    return %arg0, %c0_i32 : i32, i32
  }
  func.func @transform_1(%arg0: i32) -> (i32, i32) {
    %c0_i32 = arith.constant 0 : i32
    %c0_i32_0 = arith.constant 0 : i32
    return %arg0, %c0_i32 : i32, i32
  }
}

</mosaic_0001>

<llo_original>
// kernel: tpu_custom_call.1
$region0: #{tpu_custom_call.1}
  #allocation0 [shape = 'u32[]', space=smem, size = 0x4, offset = 0x4, fixed_abs, tag = 'smem constant byte address 0x4 - core index']
  #allocation1 [shape = 'u32[144,128]{1,0:T(1,128)}', space=vmem, size = 0x12000, scoped, tag = 'internal scratch']
  %s0 = inlined_call_operand.hbm [shape: f32[16,128], index: 0, kind: input, shape index: {}]
  %s1 = inlined_call_operand.hbm [shape: f32[16,128], index: 1, kind: output, shape index: {}]
  %s2 = sld [smem:[#allocation0]]
  $region41: #{tpu_custom_call.1} parent=0
    _
  %s4 = ssub.s32 1, %s2
  %s5 = scalar_select 0, %s4, %s2
  $region1: #{tpu_custom_call.1} parent=0
    #allocation2 [shape = 'u8[8192]{0}', space=vmem, size = 0x2000, scoped, tag = 'input window, operand 0']
    #allocation3 [shape = 's32[2]{0}', space=sflag, size = 0x8, scoped, tag = 'scoped memory for tpu_custom_call.1']
    #allocation4 [shape = 's32[2]{0}', space=sflag, size = 0x8, scoped, tag = 'scoped memory for tpu_custom_call.1']
    #allocation5 [shape = 'u8[8192]{0}', space=vmem, size = 0x2000, scoped, tag = 'output window, operand 0']
    %6 = vsyncpa [#allocation3], 0
    %s7 = scalar_lea.sflag [#allocation3], 1
    %8 = vsyncpa %s7, 0
    %9 = vsyncpa [#allocation4], 0
    %s10 = scalar_lea.sflag [#allocation4], 1
    %11 = vsyncpa %s10, 0
    loop: start=0, step=1, limit=4
    $region2: #{tpu_custom_call.1} parent=1 // loop_pre_header
      _
    $region3: #{tpu_custom_call.1} parent=1 // loop_header
      %s13 = sphi 0, %s17
      %p14 = scmp.ge.s32.totalorder %s13, 4
      %s23 = sphi 0, %s25
      %s26 = sphi 0, %s23
      %s27 = sphi 0, %s26
      %s43 = sphi 0, %s27
      %s49 = sphi 0, %s51
      %s52 = sphi 0, %s49
      %s53 = sphi 0, %s52
      %s69 = sphi 0, %s53
    $region4: #{tpu_custom_call.1} parent=1 // loop_header_branch
      %16 = sbr.rel (%p14) target = $region8
    $region5: #{tpu_custom_call.1} parent=1 // loop_body
      %s18 = ssub.s32 %s13, 1
      %s19 = ssub.s32 %s13, 2
      %s20 = sadd.s32 %s13, 1
      %s21 = ssub.s32 %s13, %s20
      %p22 = scmp.eq.s32.totalorder %s21, 0
      %s24 = sadd.s32 %s23, 1
      %s25 = scalar_select %p22, %s23, %s24
      %p28 = pneg %p22
      %p29 = scmp.eq.s32.totalorder %s13, 1
      %p30 = por %p28, %p29
      %p31 = scmp.ne.s32.totalorder %s23, %s26
      %p32 = scmp.eq.s32.totalorder %s13, 0
      %p33 = por %p31, %p32
      %p34 = scmp.ne.s32.totalorder %s23, %s26
      %p35 = scmp.eq.s32.totalorder %s18, 1
      %p36 = por %p34, %p35
      %p37 = scmp.ne.s32.totalorder %s26, %s27
      %p38 = scmp.eq.s32.totalorder %s18, 0
      %p39 = por %p37, %p38
      %p40 = scmp.ne.s32.totalorder %s26, %s27
      %p41 = scmp.eq.s32.totalorder %s19, 1
      %p42 = por %p40, %p41
      %p44 = scmp.ne.s32.totalorder %s27, %s43
      %p45 = scmp.eq.s32.totalorder %s19, 0
      %p46 = por %p44, %p45
      %s47 = ssub.s32 %s13, %s20
      %p48 = scmp.eq.s32.totalorder %s47, 0
      %s50 = sadd.s32 %s49, 1
      %s51 = scalar_select %p48, %s49, %s50
      %p54 = pneg %p48
      %p55 = scmp.eq.s32.totalorder %s13, 1
      %p56 = por %p54, %p55
      %p57 = scmp.ne.s32.totalorder %s49, %s52
      %p58 = scmp.eq.s32.totalorder %s13, 0
      %p59 = por %p57, %p58
      %p60 = scmp.ne.s32.totalorder %s49, %s52
      %p61 = scmp.eq.s32.totalorder %s18, 1
      %p62 = por %p60, %p61
      %p63 = scmp.ne.s32.totalorder %s52, %s53
      %p64 = scmp.eq.s32.totalorder %s18, 0
      %p65 = por %p63, %p64
      %p66 = scmp.ne.s32.totalorder %s52, %s53
      %p67 = scmp.eq.s32.totalorder %s19, 1
      %p68 = por %p66, %p67
      %p70 = scmp.ne.s32.totalorder %s53, %s69
      %p71 = scmp.eq.s32.totalorder %s19, 0
      %p72 = por %p70, %p71
      %p73 = scmp.le.s32.totalorder 1, %s13
      %p74 = scmp.lt.s32.totalorder %s13, 3
      %p75 = pnand %p73, %p74
      %p76 = pneg %p75
      // Predicated region
      $region9: #{tpu_custom_call.1} parent=5 // pred_check
        _
      $region10: #{tpu_custom_call.1} parent=5 // pred_check_branch
        %78 = sbr.rel (%p75) target = $region12
      $region11: #{tpu_custom_call.1} parent=5 // pred_region
        %s79 = ssub.s32 %s13, 1
      $region12: #{tpu_custom_call.1} parent=5 // pred_fallthru
        _
      %p80 = scmp.lt.s32.totalorder %s13, 2
      // Predicated region
      $region13: #{tpu_custom_call.1} parent=5 // pred_check
        %p81 = pneg %p80
      $region14: #{tpu_custom_call.1} parent=5 // pred_check_branch
        %83 = sbr.rel (%p81) target = $region16
      $region15: #{tpu_custom_call.1} parent=5 // pred_region
        // Predicated region
        $region17: #{tpu_custom_call.1} parent=15 // pred_check
          %p84 = pneg %p33
        $region18: #{tpu_custom_call.1} parent=15 // pred_check_branch
          %86 = sbr.rel (%p84) target = $region20
        $region19: #{tpu_custom_call.1} parent=15 // pred_region
          %s87 = sand.u32 %s23, 1
          %s88 = scalar_lea.sflag [#allocation3], %s87
          %s89 = sand.u32 %s23, 1
          %s90 = smul.addr %s89, 8
          %s91 = scalar_lea.vmem [#allocation2], %s90
          %s93 = ssub.s32 128, 128
          %94 = vsyncadd %s88, %s93
          %s95 = smul.addr %s13, 128
          %s96 = scalar_lea.hbm %s0, %s95
          %s98 = sshll.u32 %s91, 4
          %s99 = int_to_ptr.vmem [resolvable:$true] %s98
          %101 = dma.hbm_to_vmem [thread:$0]  %s96, 128, %s99, %s88
        $region20: #{tpu_custom_call.1} parent=15 // pred_fallthru
          _
      $region16: #{tpu_custom_call.1} parent=5 // pred_fallthru
        _
      %p102 = scmp.le.s32.totalorder 1, %s13
      %p103 = scmp.lt.s32.totalorder %s13, 3
      %p104 = pnand %p102, %p103
      %p105 = pneg %p104
      // Predicated region
      $region21: #{tpu_custom_call.1} parent=5 // pred_check
        _
      $region22: #{tpu_custom_call.1} parent=5 // pred_check_branch
        %107 = sbr.rel (%p104) target = $region24
      $region23: #{tpu_custom_call.1} parent=5 // pred_region
        %s108 = ssub.s32 %s13, 1
        %s109 = sand.u32 %s26, 1
        %s110 = scalar_lea.sflag [#allocation3], %s109
        %s111 = sand.u32 %s26, 1
        %s112 = smul.addr %s111, 8
        %s113 = scalar_lea.vmem [#allocation2], %s112
        // Predicated region
        $region25: #{tpu_custom_call.1} parent=23 // pred_check
          %p114 = pneg %p39
        $region26: #{tpu_custom_call.1} parent=23 // pred_check_branch
          %116 = sbr.rel (%p114) target = $region28
        $region27: #{tpu_custom_call.1} parent=23 // pred_region
          %117 = dma.done %s110, 128
        $region28: #{tpu_custom_call.1} parent=23 // pred_fallthru
          _
        %s118 = sand.u32 %s26, 1
        %s119 = scalar_lea.sflag [#allocation3], %s118
        %s120 = sand.u32 %s26, 1
        %s121 = smul.addr %s120, 8
        %s122 = scalar_lea.vmem [#allocation2], %s121
        %p123 = pneg %p39
        %p124 = pneg %p36
        %p125 = pneg %p65
        %p126 = pneg %p62
        %s127 = sand.u32 %s52, 1
        %s128 = scalar_lea.sflag [#allocation4], %s127
        %s129 = sand.u32 %s52, 1
        %s130 = smul.addr %s129, 8
        %s131 = scalar_lea.vmem [#allocation5], %s130
        %v132 = vld [vmem:[%s113] sm:$0xff]
        %v133 = vmul.f32 %v132, 0.5
        %v134 = vmul.f32 %v132, 0.70710677
        %v135 = verf.f32.pop %v134
        %v136 = vadd.f32 %v135, 1.0
        %v137 = vmul.f32 %v133, %v136
        %138 = vst [vmem:[%s131] sm:$0xff] %v137
        %s139 = sand.u32 %s52, 1
        %s140 = scalar_lea.sflag [#allocation4], %s139
        %s141 = sand.u32 %s52, 1
        %s142 = smul.addr %s141, 8
        %s143 = scalar_lea.vmem [#allocation5], %s142
        // Predicated region
        $region29: #{tpu_custom_call.1} parent=23 // pred_check
          %p144 = pneg %p62
        $region30: #{tpu_custom_call.1} parent=23 // pred_check_branch
          %146 = sbr.rel (%p144) target = $region32
        $region31: #{tpu_custom_call.1} parent=23 // pred_region
          %s148 = ssub.s32 128, 128
          %149 = vsyncadd %s140, %s148
          %s150 = smul.addr %s18, 128
          %s151 = scalar_lea.hbm %s1, %s150
          %s153 = sshll.u32 %s143, 4
          %s154 = int_to_ptr.vmem [resolvable:$true] %s153
          %156 = dma.vmem_to_hbm [thread:$0]  %s154, 128, %s151, %s140
        $region32: #{tpu_custom_call.1} parent=23 // pred_fallthru
          _
      $region24: #{tpu_custom_call.1} parent=5 // pred_fallthru
        _
      %p157 = scmp.le.s32.totalorder 2, %s13
      // Predicated region
      $region33: #{tpu_custom_call.1} parent=5 // pred_check
        %p158 = pneg %p157
      $region34: #{tpu_custom_call.1} parent=5 // pred_check_branch
        %160 = sbr.rel (%p158) target = $region36
      $region35: #{tpu_custom_call.1} parent=5 // pred_region
        %s161 = ssub.s32 %s13, 2
        // Predicated region
        $region37: #{tpu_custom_call.1} parent=35 // pred_check
          %p162 = pneg %p68
        $region38: #{tpu_custom_call.1} parent=35 // pred_check_branch
          %164 = sbr.rel (%p162) target = $region40
        $region39: #{tpu_custom_call.1} parent=35 // pred_region
          %s165 = sand.u32 %s53, 1
          %s166 = scalar_lea.sflag [#allocation4], %s165
          %s167 = sand.u32 %s53, 1
          %s168 = smul.addr %s167, 8
          %s169 = scalar_lea.vmem [#allocation5], %s168
          %170 = dma.done %s166, 128
        $region40: #{tpu_custom_call.1} parent=35 // pred_fallthru
          _
      $region36: #{tpu_custom_call.1} parent=5 // pred_fallthru
        _
    $region6: #{tpu_custom_call.1} parent=1 // loop_footer
      %s17 = sadd.s32 1, %s13
    $region7: #{tpu_custom_call.1} parent=1 // loop_footer_branch
      %12 = sbr.rel target = $region3
    $region8: #{tpu_custom_call.1} parent=1 // loop_exit
      _
    %171 = vsyncpa [#allocation3], 1
    %s172 = scalar_lea.sflag [#allocation3], 1
    %173 = vsyncpa %s172, 1
    %174 = vsyncpa [#allocation4], 1
    %s175 = scalar_lea.sflag [#allocation4], 1
    %176 = vsyncpa %s175, 1

</llo_original>
